<compile_context>
chip_gen: v7x
topology: tpu7x:2x2x1
jax: 0.10.0
libtpu: 0.0.40
codegen_flags: <defaults>
</compile_context>

<pallas_src>
import functools

import jax
import jax.numpy as jnp
from jax.experimental import pallas as pl
from jax.experimental.pallas import tpu as pltpu

LANE = 128                  # pad the 3-wide logits to a full lane tile in VMEM
DEFAULT_BLOCK_BATCH = 2048  # batch tile cap (multiple of 16; ~6 MiB VMEM)
_NEG = -1e30                # bias for padded logit columns -> softmax prob 0


def _round_up(x, m):
    return ((x + m - 1) // m) * m


def _pick_batch_tile(B, block_batch):
    """Sublane-aligned batch tile; aim for >=2 grid steps when possible so the
    'parallel' batch axis can shard across v7x's two TensorCores."""
    if B <= 16:
        return int(B)                          # single block (== full dim is legal)
    half = _round_up(int(pl.cdiv(B, 2)), 16)   # >= 2 grid steps for mid-size B
    tb = min(int(block_batch), half)
    return int(max(8, _round_up(tb, 8)))


def _mlp_softmax_kernel(x_ref, w1_ref, b1_ref, w2_ref, b2_ref, o_ref, *, out_size):
    # Layer 1: cast x to bf16 in-kernel (rides a free VPU slot), bf16 MXU,
    # f32 accumulation; bias add + ReLU in f32.
    x = x_ref[...].astype(jnp.bfloat16)
    h = jnp.dot(x, w1_ref[...], preferred_element_type=jnp.float32)
    h = jnp.maximum(h + b1_ref[...], 0.0)

    # Layer 2: keep h in f32 (accuracy is free at this size). W2 is padded to
    # 128 lanes with zero columns and b2 with -1e30, so padded logits vanish
    # under softmax and the lane reductions below need no masking.
    logits = jnp.dot(h, w2_ref[...], preferred_element_type=jnp.float32)
    logits = logits + b2_ref[...]

    # Numerically stable softmax over the (padded) lane axis. Exact divide for
    # the final normalize: off the critical path and keeps row sums == 1.
    m = jnp.max(logits, axis=-1, keepdims=True)
    e = jnp.exp(logits - m)
    denom = jnp.sum(e, axis=-1, keepdims=True)

    # Store only the real output columns: a (tb, out_size) masked store; the
    # padded (tb, 128) slab never touches HBM.
    o_ref[...] = (e[:, :out_size] / denom).astype(o_ref.dtype)


def prepare_params(w1, b1, w2, b2):
    """One-time parameter prep (padding / casts), hoisted out of the forward."""
    in_size, hidden = w1.shape
    out_size = int(w2.shape[1])
    out_pad = int(pl.cdiv(out_size, LANE)) * LANE

    w1_bf = jnp.asarray(w1, jnp.float32).astype(jnp.bfloat16)
    b1_f = jnp.asarray(b1, jnp.float32).reshape(1, hidden)
    w2_p = jnp.zeros((hidden, out_pad), jnp.float32).at[:, :out_size].set(
        jnp.asarray(w2, jnp.float32))
    b2_p = jnp.full((1, out_pad), _NEG, jnp.float32).at[:, :out_size].set(
        jnp.asarray(b2, jnp.float32).reshape(1, out_size))
    return (w1_bf, b1_f, w2_p, b2_p), out_size


@functools.partial(jax.jit, static_argnames=("out_size", "block_batch"))
def dummy_trading_forward(x, w1_bf, b1_f, w2_p, b2_p, *, out_size,
                          block_batch=DEFAULT_BLOCK_BATCH):
    """x: (B, input_size) f32; returns (B, out_size) f32 softmax probs."""
    B, in_size = x.shape
    hidden = w1_bf.shape[1]
    out_pad = w2_p.shape[1]

    tb = _pick_batch_tile(B, block_batch)
    grid = (int(pl.cdiv(B, tb)),)

    kernel = functools.partial(_mlp_softmax_kernel, out_size=out_size)
    return pl.pallas_call(
        kernel,
        out_shape=jax.ShapeDtypeStruct((B, out_size), jnp.float32),
        grid=grid,
        in_specs=[
            pl.BlockSpec((tb, in_size), lambda i: (i, 0)),       # streamed f32 x tile
            pl.BlockSpec((in_size, hidden), lambda i: (0, 0)),   # VMEM-resident
            pl.BlockSpec((1, hidden), lambda i: (0, 0)),         # VMEM-resident
            pl.BlockSpec((hidden, out_pad), lambda i: (0, 0)),   # VMEM-resident
            pl.BlockSpec((1, out_pad), lambda i: (0, 0)),        # VMEM-resident
        ],
        out_specs=pl.BlockSpec((tb, out_size), lambda i: (i, 0)),
        compiler_params=pltpu.CompilerParams(
            dimension_semantics=("parallel",),   # shard batch across v7x's 2 TCs
            vmem_limit_bytes=32 * 1024 * 1024,   # headroom for tb=2048 on v5e
        ),
    )(x, w1_bf, b1_f, w2_p, b2_p)


def init_params(key, input_size=12, hidden_size=64, output_size=3):
    """Deterministic PyTorch-style (Kaiming-uniform-ish) init; weights stored
    as (in_features, out_features) so the kernel computes x @ W."""
    k1, k2, k3, k4 = jax.random.split(key, 4)
    bound1 = 1.0 / jnp.sqrt(input_size)
    bound2 = 1.0 / jnp.sqrt(hidden_size)
    w1 = jax.random.uniform(k1, (input_size, hidden_size), jnp.float32,
                            minval=-bound1, maxval=bound1)
    b1 = jax.random.uniform(k2, (1, hidden_size), jnp.float32,
                            minval=-bound1, maxval=bound1)
    w2 = jax.random.uniform(k3, (hidden_size, output_size), jnp.float32,
                            minval=-bound2, maxval=bound2)
    b2 = jax.random.uniform(k4, (1, output_size), jnp.float32,
                            minval=-bound2, maxval=bound2)
    return w1, b1, w2, b2


if __name__ == "__main__":
    key = jax.random.PRNGKey(0)
    kx, kx2, kp = jax.random.split(key, 3)

    batch, input_size, hidden_size, output_size = 8, 12, 64, 3
    x = jax.random.normal(kx, (batch, input_size), jnp.float32)
    w1, b1, w2, b2 = init_params(kp, input_size, hidden_size, output_size)

    params, out_size = prepare_params(w1, b1, w2, b2)   # one-time weight prep

    out = jax.block_until_ready(
        dummy_trading_forward(x, *params, out_size=out_size))

    # shape + rows sum to 1 (exact divide in the kernel)
    assert out.shape == (batch, output_size)
    assert bool(jnp.allclose(jnp.sum(out, axis=1), 1.0, atol=1e-3))

    # Reference mirroring the kernel's quantization: bf16 x/W1 on the first
    # matmul, everything else f32.
    def ref_mixed(x, w1, b1, w2, b2):
        q = lambda a: a.astype(jnp.bfloat16).astype(jnp.float32)
        h = jnp.maximum(q(x) @ q(w1) + b1, 0.0)
        return jax.nn.softmax(h @ w2 + b2, axis=1)

    assert bool(jnp.allclose(out, ref_mixed(x, w1, b1, w2, b2), atol=1e-2))

    # Loose check against the pure-f32 reference (bf16 first layer ~1e-2 level).
    ref_f = jax.nn.softmax(jnp.maximum(x @ w1 + b1, 0.0) @ w2 + b2, axis=1)
    assert bool(jnp.allclose(out, ref_f, atol=5e-2))

    # Multi-step grid with a partial last tile (no wrapper-side padding of x).
    batch2 = 40
    x2 = jax.random.normal(kx2, (batch2, input_size), jnp.float32)
    out2 = jax.block_until_ready(
        dummy_trading_forward(x2, *params, out_size=out_size, block_batch=16))
    assert out2.shape == (batch2, output_size)
    assert bool(jnp.allclose(jnp.sum(out2, axis=1), 1.0, atol=1e-3))
    assert bool(jnp.allclose(out2, ref_mixed(x2, w1, b1, w2, b2), atol=1e-2))

    print("KERNEL_OK")
</pallas_src>

<mosaic_0001>
module attributes {stable_mosaic.version = 11 : i64} {
  func.func @_mlp_softmax_kernel(%arg0: i32, %arg1: memref<8x12xf32, #tpu.memory_space<vmem>>, %arg2: memref<12x64xbf16, #tpu.memory_space<vmem>>, %arg3: memref<1x64xf32, #tpu.memory_space<vmem>>, %arg4: memref<64x128xf32, #tpu.memory_space<vmem>>, %arg5: memref<1x128xf32, #tpu.memory_space<vmem>>, %arg6: memref<8x3xf32, #tpu.memory_space<vmem>>) attributes {dimension_semantics = [#tpu.dimension_semantics<parallel>], iteration_bounds = array<i64: 1>, scalar_prefetch = 0 : i64, scratch_operands = 0 : i64, tpu.core_type = #tpu.core_type<tc>, window_params = [{transform_indices = @transform_0, window_bounds = array<i64: 8, 12>}, {pipeline_mode = #tpu.pipeline_mode<synchronous>, transform_indices = @transform_1, window_bounds = array<i64: 12, 64>}, {pipeline_mode = #tpu.pipeline_mode<synchronous>, transform_indices = @transform_2, window_bounds = array<i64: 1, 64>}, {pipeline_mode = #tpu.pipeline_mode<synchronous>, transform_indices = @transform_3, window_bounds = array<i64: 64, 128>}, {pipeline_mode = #tpu.pipeline_mode<synchronous>, transform_indices = @transform_4, window_bounds = array<i64: 1, 128>}, {transform_indices = @transform_5, window_bounds = array<i64: 8, 3>}]} {
    %c0 = arith.constant 0 : index
    %c0_0 = arith.constant 0 : index
    %0 = vector.load %arg1[%c0, %c0_0] : memref<8x12xf32, #tpu.memory_space<vmem>>, vector<8x12xf32>
    %1 = arith.truncf %0 : vector<8x12xf32> to vector<8x12xbf16>
    %c0_1 = arith.constant 0 : index
    %c0_2 = arith.constant 0 : index
    %2 = vector.load %arg2[%c0_1, %c0_2] : memref<12x64xbf16, #tpu.memory_space<vmem>>, vector<12x64xbf16>
    %cst = arith.constant dense<0.000000e+00> : vector<8x64xf32>
    %3 = tpu.matmul %1, %2, %cst {dimension_numbers = #tpu.dot_dimension_numbers<[1], [0], [0], [1], [0, 0, 1, 1], [], []>} : vector<8x12xbf16>, vector<12x64xbf16>, vector<8x64xf32> -> vector<8x64xf32>
    %c0_3 = arith.constant 0 : index
    %c0_4 = arith.constant 0 : index
    %4 = vector.load %arg3[%c0_3, %c0_4] : memref<1x64xf32, #tpu.memory_space<vmem>>, vector<1x64xf32>
    %5 = vector.broadcast %4 : vector<1x64xf32> to vector<8x64xf32>
    %6 = arith.addf %3, %5 : vector<8x64xf32>
    %cst_5 = arith.constant 0.000000e+00 : f32
    %7 = vector.broadcast %cst_5 : f32 to vector<8x64xf32>
    %8 = arith.maximumf %6, %7 : vector<8x64xf32>
    %c0_6 = arith.constant 0 : index
    %c0_7 = arith.constant 0 : index
    %9 = vector.load %arg4[%c0_6, %c0_7] : memref<64x128xf32, #tpu.memory_space<vmem>>, vector<64x128xf32>
    %cst_8 = arith.constant dense<0.000000e+00> : vector<8x128xf32>
    %10 = tpu.matmul %8, %9, %cst_8 {dimension_numbers = #tpu.dot_dimension_numbers<[1], [0], [0], [1], [0, 0, 1, 1], [], []>} : vector<8x64xf32>, vector<64x128xf32>, vector<8x128xf32> -> vector<8x128xf32>
    %c0_9 = arith.constant 0 : index
    %c0_10 = arith.constant 0 : index
    %11 = vector.load %arg5[%c0_9, %c0_10] : memref<1x128xf32, #tpu.memory_space<vmem>>, vector<1x128xf32>
    %12 = vector.broadcast %11 : vector<1x128xf32> to vector<8x128xf32>
    %13 = arith.addf %10, %12 : vector<8x128xf32>
    %cst_11 = arith.constant dense<0xFF800000> : vector<8xf32>
    %14 = vector.multi_reduction <maximumf>, %13, %cst_11 [1] : vector<8x128xf32> to vector<8xf32>
    %15 = vector.shape_cast %14 : vector<8xf32> to vector<8x1xf32>
    %16 = vector.broadcast %15 : vector<8x1xf32> to vector<8x128xf32>
    %17 = arith.subf %13, %16 : vector<8x128xf32>
    %18 = math.exp %17 : vector<8x128xf32>
    %cst_12 = arith.constant dense<0.000000e+00> : vector<8xf32>
    %19 = vector.multi_reduction <add>, %18, %cst_12 [1] : vector<8x128xf32> to vector<8xf32>
    %20 = vector.shape_cast %19 : vector<8xf32> to vector<8x1xf32>
    %21 = vector.extract_strided_slice %18 {offsets = [0, 0], sizes = [8, 3], strides = [1, 1]} : vector<8x128xf32> to vector<8x3xf32>
    %22 = vector.broadcast %20 : vector<8x1xf32> to vector<8x3xf32>
    %23 = arith.divf %21, %22 : vector<8x3xf32>
    %c0_13 = arith.constant 0 : index
    %c0_14 = arith.constant 0 : index
    %24 = vector.load %arg6[%c0_13, %c0_14] : memref<8x3xf32, #tpu.memory_space<vmem>>, vector<8x3xf32>
    tpu.vector_store %arg6[%c0_13, %c0_14], %23 {strides = array<i32>} : memref<8x3xf32, #tpu.memory_space<vmem>>, vector<8x3xf32>,
    return
  }
  func.func @transform_0(%arg0: i32) -> (i32, i32) {
    %c0_i32 = arith.constant 0 : i32
    %c0_i32_0 = arith.constant 0 : i32
    return %arg0, %c0_i32 : i32, i32
  }
  func.func @transform_1(%arg0: i32) -> (i32, i32) {
    %c0_i32 = arith.constant 0 : i32
    %c0_i32_0 = arith.constant 0 : i32
    %c0_i32_1 = arith.constant 0 : i32
    return %c0_i32, %c0_i32_0 : i32, i32
  }
  func.func @transform_2(%arg0: i32) -> (i32, i32) {
    %c0_i32 = arith.constant 0 : i32
    %c0_i32_0 = arith.constant 0 : i32
    %c0_i32_1 = arith.constant 0 : i32
    return %c0_i32, %c0_i32_0 : i32, i32
  }
  func.func @transform_3(%arg0: i32) -> (i32, i32) {
    %c0_i32 = arith.constant 0 : i32
    %c0_i32_0 = arith.constant 0 : i32
    %c0_i32_1 = arith.constant 0 : i32
    return %c0_i32, %c0_i32_0 : i32, i32
  }
  func.func @transform_4(%arg0: i32) -> (i32, i32) {
    %c0_i32 = arith.constant 0 : i32
    %c0_i32_0 = arith.constant 0 : i32
    %c0_i32_1 = arith.constant 0 : i32
    return %c0_i32, %c0_i32_0 : i32, i32
  }
  func.func @transform_5(%arg0: i32) -> (i32, i32) {
    %c0_i32 = arith.constant 0 : i32
    %c0_i32_0 = arith.constant 0 : i32
    return %arg0, %c0_i32 : i32, i32
  }
}

</mosaic_0001>

<llo_original>
// kernel: dummy_trading_forward.1
$region0: #{dummy_trading_forward.1}
  #allocation0 [shape = 'u32[]', space=smem, size = 0x4, offset = 0x4, fixed_abs, tag = 'smem constant byte address 0x4 - core index']
  #allocation1 [shape = 'u32[144,128]{1,0:T(1,128)}', space=vmem, size = 0x12000, scoped, tag = 'internal scratch']
  %s0 = inlined_call_operand.hbm [shape: f32[8,12], index: 0, kind: input, shape index: {}]
  %s1 = inlined_call_operand.hbm [shape: bf16[12,64], index: 1, kind: input, shape index: {}]
  %s2 = inlined_call_operand.vmem [shape: f32[1,64], index: 2, kind: input, shape index: {}]
  %s3 = inlined_call_operand.hbm [shape: f32[64,128], index: 3, kind: input, shape index: {}]
  %s4 = inlined_call_operand.vmem [shape: f32[1,128], index: 4, kind: input, shape index: {}]
  %s5 = inlined_call_operand.vmem [shape: f32[8,3], index: 5, kind: output, shape index: {}]
  %s6 = sld [smem:[#allocation0]]
  $region42: #{dummy_trading_forward.1} parent=0
    _
  %s8 = ssub.s32 1, %s6
  %s9 = scalar_select 0, %s8, %s6
  $region1: #{dummy_trading_forward.1} parent=0
    #allocation2 [shape = 'u8[4096]{0}', space=vmem, size = 0x1000, scoped, tag = 'input window, operand 0, single buffered']
    #allocation3 [shape = 's32[1]{0}', space=sflag, size = 0x4, scoped, tag = 'scoped memory for dummy_trading_forward.1']
    #allocation4 [shape = 'u8[4096]{0}', space=vmem, size = 0x1000, scoped, tag = 'input window, operand 1, single buffered']
    #allocation5 [shape = 's32[1]{0}', space=sflag, size = 0x4, scoped, tag = 'scoped memory for dummy_trading_forward.1']
    #allocation6 [shape = 'u8[32768]{0}', space=vmem, size = 0x8000, scoped, tag = 'input window, operand 3, single buffered']
    %10 = vsyncpa [#allocation3], 0
    %11 = vsyncpa [#allocation5], 0
    // Predicated region
    $region2: #{dummy_trading_forward.1} parent=1 // pred_check
      _
    $region3: #{dummy_trading_forward.1} parent=1 // pred_check_branch
      %13 = sbr.rel (0) target = $region5
    $region4: #{dummy_trading_forward.1} parent=1 // pred_region
      %s15 = ssub.s32 128, 128
      %16 = vsyncadd [#allocation3], %s15
      %s18 = sshll.u32 [#allocation2], 4
      %s19 = int_to_ptr.vmem [resolvable:$true] %s18
      %21 = dma.hbm_to_vmem [thread:$0]  %s0, 128, %s19, [#allocation3]
    $region5: #{dummy_trading_forward.1} parent=1 // pred_fallthru
      _
    // Predicated region
    $region6: #{dummy_trading_forward.1} parent=1 // pred_check
      _
    $region7: #{dummy_trading_forward.1} parent=1 // pred_check_branch
      %23 = sbr.rel (0) target = $region9
    $region8: #{dummy_trading_forward.1} parent=1 // pred_region
      %s25 = ssub.s32 128, 128
      %26 = vsyncadd [#allocation5], %s25
      %s27 = sshll.u32 [#allocation4], 4
      %s28 = int_to_ptr.vmem [resolvable:$true] %s27
      %33 = dma.hbm_to_vmem [thread:$0]  %s1, 128, %s28, [#allocation5], 64, 64, 4
    $region9: #{dummy_trading_forward.1} parent=1 // pred_fallthru
      _
    // Predicated region
    $region10: #{dummy_trading_forward.1} parent=1 // pred_check
      _
    $region11: #{dummy_trading_forward.1} parent=1 // pred_check_branch
      %35 = sbr.rel (0) target = $region13
    $region12: #{dummy_trading_forward.1} parent=1 // pred_region
      _
    $region13: #{dummy_trading_forward.1} parent=1 // pred_fallthru
      _
    // Predicated region
    $region14: #{dummy_trading_forward.1} parent=1 // pred_check
      _
    $region15: #{dummy_trading_forward.1} parent=1 // pred_check_branch
      %37 = sbr.rel (0) target = $region17
    $region16: #{dummy_trading_forward.1} parent=1 // pred_region
      %s39 = ssub.s32 1024, 1024
      %40 = vsyncadd [#allocation5], %s39
      %s41 = sshll.u32 [#allocation6], 4
      %s42 = int_to_ptr.vmem [resolvable:$true] %s41
      %47 = dma.hbm_to_vmem [thread:$0]  %s3, 1024, %s42, [#allocation5], 128, 128, 8
    $region17: #{dummy_trading_forward.1} parent=1 // pred_fallthru
      _
    // Predicated region
    $region18: #{dummy_trading_forward.1} parent=1 // pred_check
      _
    $region19: #{dummy_trading_forward.1} parent=1 // pred_check_branch
      %49 = sbr.rel (0) target = $region21
    $region20: #{dummy_trading_forward.1} parent=1 // pred_region
      _
    $region21: #{dummy_trading_forward.1} parent=1 // pred_fallthru
      _
    // Predicated region
    $region22: #{dummy_trading_forward.1} parent=1 // pred_check
      _
    $region23: #{dummy_trading_forward.1} parent=1 // pred_check_branch
      %51 = sbr.rel (0) target = $region25
    $region24: #{dummy_trading_forward.1} parent=1 // pred_region
      %52 = dma.done [#allocation3], 128
    $region25: #{dummy_trading_forward.1} parent=1 // pred_fallthru
      _
    // Predicated region
    $region26: #{dummy_trading_forward.1} parent=1 // pred_check
      _
    $region27: #{dummy_trading_forward.1} parent=1 // pred_check_branch
      %54 = sbr.rel (0) target = $region29
    $region28: #{dummy_trading_forward.1} parent=1 // pred_region
      %55 = dma.done [#allocation5], 128
    $region29: #{dummy_trading_forward.1} parent=1 // pred_fallthru
      _
    // Predicated region
    $region30: #{dummy_trading_forward.1} parent=1 // pred_check
      _
    $region31: #{dummy_trading_forward.1} parent=1 // pred_check_branch
      %57 = sbr.rel (0) target = $region33
    $region32: #{dummy_trading_forward.1} parent=1 // pred_region
      %58 = dma.done [#allocation5], 1024
    $region33: #{dummy_trading_forward.1} parent=1 // pred_fallthru
      _
    %v60 = vld [vmem:[#allocation2] sm:$0xff]
    %v61 = vpack.c.bf16 %v60, %v60
    %v62 = vld [vmem:[#allocation4] sm:$0xf]
    %v63 = vld [vmem:[#allocation4 + $0x4] sm:$0x3]
    %v64 = vld [vmem:[%s2] sm:$0x1]
    %v66 = vlaneseq
    %v67 = vshrl.u32 %v66, 7
    %v68 = vsub.s32 0, %v67
    %v69 = vrot.slane %v64, %v68
    %v73 = vunpack.c.l.b16 %v62
    %v74 = vunpack.c.l.b16 %v63
    %v75 = vpack.c.b16 %v74, %v73
    %vm76 = vcmask 97280
    %v78 = vsel %vm76, %v61, 0
    %vm80 = vcmask 1045504
    %v82 = vsel %vm80, %v75, 0
    %84 = vmatprep.subr.bf16.mxu0 0
    %85 = vmatpush1.bf16.msra.mxu0 %v82
    %86 = vmatprep.subr.bf16.mxu0 0
    %87 = vmatpush1.bf16.msra.mxu0 0
    %88 = vmatprep.subr.bf16.mxu0 0
    %89 = vmatpush1.bf16.msra.mxu0 0
    %90 = vmatprep.subr.bf16.mxu0 0
    %91 = vmatpush1.bf16.msra.mxu0 0
    %92 = vmatprep.subr.bf16.mxu0 0
    %93 = vmatpush1.bf16.msra.mxu0 0
    %94 = vmatprep.subr.bf16.mxu0 0
    %95 = vmatpush1.bf16.msra.mxu0 0
    %96 = vmatprep.subr.bf16.mxu0 0
    %97 = vmatpush1.bf16.msra.mxu0 0
    %98 = vmatprep.subr.bf16.mxu0 0
    %99 = vmatpush1.bf16.msra.mxu0 0
    %100 = vmatprep.subr.bf16.mxu0 0
    %101 = vmatpush1.bf16.msra.mxu0 0
    %102 = vmatprep.subr.bf16.mxu0 0
    %103 = vmatpush1.bf16.msra.mxu0 0
    %104 = vmatprep.subr.bf16.mxu0 0
    %105 = vmatpush1.bf16.msra.mxu0 0
    %106 = vmatprep.subr.bf16.mxu0 0
    %107 = vmatpush1.bf16.msra.mxu0 0
    %108 = vmatprep.subr.bf16.mxu0 0
    %109 = vmatpush1.bf16.msra.mxu0 0
    %110 = vmatprep.subr.bf16.mxu0 0
    %111 = vmatpush1.bf16.msra.mxu0 0
    %112 = vmatprep.subr.bf16.mxu0 0
    %113 = vmatpush1.bf16.msra.mxu0 0
    %114 = vmatprep.subr.bf16.mxu0 0
    %115 = vmatpush1.bf16.msra.mxu0 0
    %116 = vmatprep.mubr.bf16.mxu0 0
    %117 = vmatmul.mubr.bf16.gmra.mrb[0].mxu0 %v78
    %v118 = vpop.f32.mrb[0].mxu0
    %v119 = vadd.f32 %v69, %v118
    %v120 = vpop.f32.mrb[0].mxu0
    %v121 = vpop.f32.mrb[0].mxu0
    %v122 = vpop.f32.mrb[0].mxu0
    %123 = vdwg.mxu0
    %v124 = vmax.f32 %v119, 0.0
    %v125 = vld [vmem:[#allocation6] sm:$0xff]
    %v126 = vld [vmem:[#allocation6 + $0x8] sm:$0xff]
    %v127 = vld [vmem:[#allocation6 + $0x10] sm:$0xff]
    %v128 = vld [vmem:[#allocation6 + $0x18] sm:$0xff]
    %v129 = vld [vmem:[#allocation6 + $0x20] sm:$0xff]
    %v130 = vld [vmem:[#allocation6 + $0x28] sm:$0xff]
    %v131 = vld [vmem:[#allocation6 + $0x30] sm:$0xff]
    %v132 = vld [vmem:[#allocation6 + $0x38] sm:$0xff]
    %v133 = vld [vmem:[%s4] sm:$0x1]
    %v135 = vlaneseq
    %v136 = vshrl.u32 %v135, 7
    %v137 = vsub.s32 0, %v136
    %v138 = vrot.slane %v133, %v137
    %vm140 = vcmask 523264
    %v142 = vsel %vm140, %v124, 0
    %144 = vmatprep.subr.mxu0 0.0
    %145 = vmatpush1.msra.mxu0 %v125
    %146 = vmatprep.subr.mxu0 0.0
    %147 = vmatpush1.msra.mxu0 %v126
    %148 = vmatprep.subr.mxu0 0.0
    %149 = vmatpush1.msra.mxu0 %v127
    %150 = vmatprep.subr.mxu0 0.0
    %151 = vmatpush1.msra.mxu0 %v128
    %152 = vmatprep.subr.mxu0 0.0
    %153 = vmatpush1.msra.mxu0 %v129
    %154 = vmatprep.subr.mxu0 0.0
    %155 = vmatpush1.msra.mxu0 %v130
    %156 = vmatprep.subr.mxu0 0.0
    %157 = vmatpush1.msra.mxu0 %v131
    %158 = vmatprep.subr.mxu0 0.0
    %159 = vmatpush1.msra.mxu0 %v132
    %160 = vmatprep.subr.mxu0 0.0
    %161 = vmatpush1.msra.mxu0 0.0
    %162 = vmatprep.subr.mxu0 0.0
    %163 = vmatpush1.msra.mxu0 0.0
    %164 = vmatprep.subr.mxu0 0.0
    %165 = vmatpush1.msra.mxu0 0.0
    %166 = vmatprep.subr.mxu0 0.0
    %167 = vmatpush1.msra.mxu0 0.0
    %168 = vmatprep.subr.mxu0 0.0
    %169 = vmatpush1.msra.mxu0 0.0
    %170 = vmatprep.subr.mxu0 0.0
    %171 = vmatpush1.msra.mxu0 0.0
    %172 = vmatprep.subr.mxu0 0.0
    %173 = vmatpush1.msra.mxu0 0.0
    %174 = vmatprep.subr.mxu0 0.0
    %175 = vmatpush1.msra.mxu0 0.0
    %176 = vmatprep.subr.mxu0 0.0
    %177 = vmatpush1.msra.mxu0 0.0
    %178 = vmatprep.subr.mxu0 0.0
    %179 = vmatpush1.msra.mxu0 0.0
    %180 = vmatprep.subr.mxu0 0.0
    %181 = vmatpush1.msra.mxu0 0.0
    %182 = vmatprep.subr.mxu0 0.0
    %183 = vmatpush1.msra.mxu0 0.0
    %184 = vmatprep.subr.mxu0 0.0
    %185 = vmatpush1.msra.mxu0 0.0
    %186 = vmatprep.subr.mxu0 0.0
    %187 = vmatpush1.msra.mxu0 0.0
    %188 = vmatprep.subr.mxu0 0.0
    %189 = vmatpush1.msra.mxu0 0.0
    %190 = vmatprep.subr.mxu0 0.0
    %191 = vmatpush1.msra.mxu0 0.0
    %192 = vmatprep.subr.mxu0 0.0
    %193 = vmatpush1.msra.mxu0 0.0
    %194 = vmatprep.subr.mxu0 0.0
    %195 = vmatpush1.msra.mxu0 0.0
    %196 = vmatprep.subr.mxu0 0.0
    %197 = vmatpush1.msra.mxu0 0.0
    %198 = vmatprep.subr.mxu0 0.0
    %199 = vmatpush1.msra.mxu0 0.0
    %200 = vmatprep.subr.mxu0 0.0
    %201 = vmatpush1.msra.mxu0 0.0
    %202 = vmatprep.subr.mxu0 0.0
    %203 = vmatpush1.msra.mxu0 0.0
    %204 = vmatprep.subr.mxu0 0.0
    %205 = vmatpush1.msra.mxu0 0.0
    %206 = vmatprep.subr.mxu0 0.0
    %207 = vmatpush1.msra.mxu0 0.0
    %208 = vmatprep.mubr.f32.mxu0 0.0
    %209 = vmatmul.mubr.f32.gmra.mrb[0].mxu0 %v142
    %v210 = vpop.f32.mrb[0].mxu0
    %v211 = vadd.f32 %v138, %v210
    %v212 = vpop.f32.mrb[0].mxu0
    %213 = vdwg.mxu0
    %214 = vmax.xlane.f32.xlu0 %v211
    %v215 = vpop.xlane.xlu0 %214
    %v216 = vsub.f32 %v211, %v215
    %v217 = vmul.f32 %v216, 1.442695
    %v218 = vpow.pop %v217
    %219 = vadd.xlane.f32.xlu0 %v218
    %v220 = vpop.xlane.xlu0 %219
    %v221 = vrcp.pop %v220
    %v222 = vmul.f32 %v218, %v221
    %vm223 = vcmask 23552
    %224 = vst.msk [vmem:[%s5] sm:$0xff] %vm223, %v222
    // Predicated region
    $region34: #{dummy_trading_forward.1} parent=1 // pred_check
      _
    $region35: #{dummy_trading_forward.1} parent=1 // pred_check_branch
      %226 = sbr.rel (0) target = $region37
    $region36: #{dummy_trading_forward.1} parent=1 // pred_region
      _
    $region37: #{dummy_trading_forward.1} parent=1 // pred_fallthru
      _
    // Predicated region
    $region38: #{dummy_trading_forward.1} parent=1 // pred_check
      _
    $region39: #{dummy_trading_forward.1} parent=1 // pred_check_branch
      %228 = sbr.rel (0) target = $region41
    $region40: #{dummy_trading_forward.1} parent=1 // pred_region
      _
    $region41: #{dummy_trading_forward.1} parent=1 // pred_fallthru
      _
    %229 = vsyncpa [#allocation3], 1
    %230 = vsyncpa [#allocation5], 1

</llo_original>
